<compile_context>
chip_gen: v6e
topology: v6e:2x2x1
jax: 0.10.0
libtpu: 0.0.40
codegen_flags: <defaults>
</compile_context>

<pallas_src>
import jax
import jax.numpy as jnp
from jax.experimental import pallas as pl
from jax.experimental.pallas import tpu as pltpu


# Fixed-point quantizer parameters (forward_num = FixedPoint(wl=8, fl=6)).
_WL = 8
_FL = 6
_STEP = 2.0 ** (-_FL)                       # 1/64
_QMAX = 2.0 ** (_WL - _FL - 1) - _STEP      # 2 - 1/64
_QMIN = -(2.0 ** (_WL - _FL - 1))           # -2

_LANE = 128      # lane width
_SUBLANE = 8     # f32 sublane granularity
_NEG_BIG = -1e30 # bias for padded class columns (never wins max, exp -> 0)


def _net_kernel(x_ref, w1_ref, b1_ref, w2_ref, b2_ref, out_ref):
    # x_ref: (TB, D) f32, w1_ref: (D, H) bf16, b1_ref: (1, H) f32,
    # w2_ref: (H, Cp) bf16, b2_ref: (1, Cp) f32, out_ref: (TB, Cp) f32
    # fc1 on the MXU: bf16 operands, f32 accumulation.
    x = x_ref[...].astype(jnp.bfloat16)
    h = jnp.dot(x, w1_ref[...], preferred_element_type=jnp.float32) + b1_ref[...]

    # relu + scale (f32, VPU)
    h = jnp.maximum(h, 0.0) * 0.1

    # Q: fixed-point quantize, wl=8, fl=6, nearest rounding, clamp to range.
    # TODO(synk): jnp.round is round-half-to-even; qtorch 'nearest' may break exact
    # ties half-away-from-zero (one quantization step difference on boundaries).
    h = jnp.clip(jnp.round(h * (1.0 / _STEP)) * _STEP, _QMIN, _QMAX)

    # dropout(p=0.5): identity at inference time.
    # TODO(synk): training-mode dropout would use pltpu.prng_seed/prng_random_bits.

    # fc2: quantized h is k/64 with |k| <= 128 -> bf16 cast is lossless.
    logits = (
        jnp.dot(h.astype(jnp.bfloat16), w2_ref[...], preferred_element_type=jnp.float32)
        + b2_ref[...]
    )

    # log_softmax over the (lane-dense, padded) class axis; padded lanes carry a
    # -1e30 bias so they never win the max and contribute exp(.) == 0 to the sum.
    m = jnp.max(logits, axis=1, keepdims=True)
    shifted = logits - m
    lse = jnp.log(jnp.sum(jnp.exp(shifted), axis=1, keepdims=True))
    out_ref[...] = (shifted - lse).astype(out_ref.dtype)


def _round_up(v, m):
    return ((v + m - 1) // m) * m


def tensorized_net_lp_forward(x_nchw, w1, b1, w2, b2, *, block_b=128):
    """x_nchw: (B, C, H, W) float32. Returns log-softmax logits (B, num_classes)."""
    B = x_nchw.shape[0]
    x_flat = x_nchw.reshape(B, -1).astype(jnp.float32)  # torch.flatten(x, 1)
    D, H = w1.shape
    _, C = w2.shape
    assert x_flat.shape[1] == D

    # Batch tile: at least 8 rows (f32 sublane), at most block_b rows per grid step.
    tb = min(block_b, _round_up(B, _SUBLANE))
    b_pad = _round_up(B, tb)
    if b_pad != B:
        x_flat = jnp.pad(x_flat, ((0, b_pad - B), (0, 0)))

    # Lane-dense output: pad classes up to a multiple of 128.
    c_pad = _round_up(C, _LANE)
    w2p = jnp.pad(w2, ((0, 0), (0, c_pad - C)))
    b2p = jnp.pad(
        b2.reshape(1, C).astype(jnp.float32),
        ((0, 0), (0, c_pad - C)),
        constant_values=_NEG_BIG,
    )

    # bf16 weights: halves HBM weight traffic, bf16-native MXU path on v6e/v7x.
    w1_bf = w1.astype(jnp.bfloat16)
    w2_bf = w2p.astype(jnp.bfloat16)
    b1_f32 = b1.reshape(1, H).astype(jnp.float32)

    grid = (b_pad // tb,)
    out = pl.pallas_call(
        _net_kernel,
        out_shape=jax.ShapeDtypeStruct((b_pad, c_pad), jnp.float32),
        grid_spec=pltpu.PrefetchScalarGridSpec(
            num_scalar_prefetch=0,
            grid=grid,
            in_specs=[
                pl.BlockSpec((tb, D), lambda i: (i, 0)),     # activation stream
                pl.BlockSpec((D, H), lambda i: (0, 0)),      # weights stay resident
                pl.BlockSpec((1, H), lambda i: (0, 0)),
                pl.BlockSpec((H, c_pad), lambda i: (0, 0)),
                pl.BlockSpec((1, c_pad), lambda i: (0, 0)),
            ],
            out_specs=pl.BlockSpec((tb, c_pad), lambda i: (i, 0)),
        ),
        compiler_params=pltpu.CompilerParams(
            dimension_semantics=("parallel",),   # batch tiles shard across TCs (v7x)
        ),
    )(x_flat, w1_bf, b1_f32, w2_bf, b2p)

    return out[:B, :C]


def _ref_forward(x_nchw, w1, b1, w2, b2):
    """Pure-JAX reference matching the kernel's bf16-operand matmul precision."""
    x = x_nchw.reshape(x_nchw.shape[0], -1)
    h = (
        jnp.dot(x.astype(jnp.bfloat16), w1.astype(jnp.bfloat16),
                preferred_element_type=jnp.float32)
        + b1.reshape(1, -1)
    )
    h = jnp.maximum(h, 0.0) * 0.1
    h = jnp.clip(jnp.round(h / _STEP) * _STEP, _QMIN, _QMAX)
    logits = (
        jnp.dot(h.astype(jnp.bfloat16), w2.astype(jnp.bfloat16),
                preferred_element_type=jnp.float32)
        + b2.reshape(1, -1)
    )
    return jax.nn.log_softmax(logits, axis=1)


if __name__ == "__main__":
    # Small shapes consistent with the module: flatten -> fc1 -> (512) -> fc2 -> 10.
    B, C_in, HH, WW = 2, 1, 16, 16          # input image (NCHW)
    D = C_in * HH * WW                       # 256 flattened features
    HID = 512                                # fc1 out (matches BatchNorm1d(512))
    NCLS = 10                                # fc2 out (MNIST classes)

    key = jax.random.PRNGKey(0)
    kx, k1, kb1, k2, kb2 = jax.random.split(key, 5)

    x = jax.random.normal(kx, (B, C_in, HH, WW), dtype=jnp.float32)
    # Deterministic parameter init (stand-in for the tensorized fc1/fc2 modules).
    w1 = jax.random.normal(k1, (D, HID), dtype=jnp.float32) * (1.0 / jnp.sqrt(D))
    b1 = jax.random.normal(kb1, (1, HID), dtype=jnp.float32) * 0.01
    w2 = jax.random.normal(k2, (HID, NCLS), dtype=jnp.float32) * (1.0 / jnp.sqrt(HID))
    b2 = jax.random.normal(kb2, (1, NCLS), dtype=jnp.float32) * 0.01

    out = jax.block_until_ready(tensorized_net_lp_forward(x, w1, b1, w2, b2))
    ref = jax.block_until_ready(_ref_forward(x, w1, b1, w2, b2))

    assert out.shape == (B, NCLS), out.shape
    # Both kernel and reference use bf16 matmul operands with f32 accumulation;
    # tolerance covers accumulation-order / quantization-boundary jitter.
    assert jnp.allclose(out, ref, atol=2e-2, rtol=0.0), float(jnp.max(jnp.abs(out - ref)))
    # log-softmax rows should exponentiate-sum to ~1 over the real 10 classes.
    assert jnp.allclose(jnp.sum(jnp.exp(out), axis=1), 1.0, atol=1e-3)

    print("KERNEL_OK")
</pallas_src>

<mosaic_0001>
module attributes {stable_mosaic.version = 11 : i64} {
  func.func @_net_kernel(%arg0: i32, %arg1: memref<8x256xf32, #tpu.memory_space<vmem>>, %arg2: memref<256x512xbf16, #tpu.memory_space<vmem>>, %arg3: memref<1x512xf32, #tpu.memory_space<vmem>>, %arg4: memref<512x128xbf16, #tpu.memory_space<vmem>>, %arg5: memref<1x128xf32, #tpu.memory_space<vmem>>, %arg6: memref<8x128xf32, #tpu.memory_space<vmem>>) attributes {dimension_semantics = [#tpu.dimension_semantics<parallel>], iteration_bounds = array<i64: 1>, scalar_prefetch = 0 : i64, scratch_operands = 0 : i64, tpu.core_type = #tpu.core_type<tc>, window_params = [{transform_indices = @transform_0, window_bounds = array<i64: 8, 256>}, {pipeline_mode = #tpu.pipeline_mode<synchronous>, transform_indices = @transform_1, window_bounds = array<i64: 256, 512>}, {pipeline_mode = #tpu.pipeline_mode<synchronous>, transform_indices = @transform_2, window_bounds = array<i64: 1, 512>}, {pipeline_mode = #tpu.pipeline_mode<synchronous>, transform_indices = @transform_3, window_bounds = array<i64: 512, 128>}, {pipeline_mode = #tpu.pipeline_mode<synchronous>, transform_indices = @transform_4, window_bounds = array<i64: 1, 128>}, {transform_indices = @transform_5, window_bounds = array<i64: 8, 128>}]} {
    %c0 = arith.constant 0 : index
    %c0_0 = arith.constant 0 : index
    %0 = vector.load %arg1[%c0, %c0_0] : memref<8x256xf32, #tpu.memory_space<vmem>>, vector<8x256xf32>
    %1 = arith.truncf %0 : vector<8x256xf32> to vector<8x256xbf16>
    %c0_1 = arith.constant 0 : index
    %c0_2 = arith.constant 0 : index
    %2 = vector.load %arg2[%c0_1, %c0_2] : memref<256x512xbf16, #tpu.memory_space<vmem>>, vector<256x512xbf16>
    %cst = arith.constant dense<0.000000e+00> : vector<8x512xf32>
    %3 = tpu.matmul %1, %2, %cst {dimension_numbers = #tpu.dot_dimension_numbers<[1], [0], [0], [1], [0, 0, 1, 1], [], []>} : vector<8x256xbf16>, vector<256x512xbf16>, vector<8x512xf32> -> vector<8x512xf32>
    %c0_3 = arith.constant 0 : index
    %c0_4 = arith.constant 0 : index
    %4 = vector.load %arg3[%c0_3, %c0_4] : memref<1x512xf32, #tpu.memory_space<vmem>>, vector<1x512xf32>
    %5 = vector.broadcast %4 : vector<1x512xf32> to vector<8x512xf32>
    %6 = arith.addf %3, %5 : vector<8x512xf32>
    %cst_5 = arith.constant 0.000000e+00 : f32
    %7 = vector.broadcast %cst_5 : f32 to vector<8x512xf32>
    %8 = arith.maximumf %6, %7 : vector<8x512xf32>
    %cst_6 = arith.constant 1.000000e-01 : f32
    %9 = vector.broadcast %cst_6 : f32 to vector<8x512xf32>
    %10 = arith.mulf %8, %9 : vector<8x512xf32>
    %cst_7 = arith.constant 6.400000e+01 : f32
    %11 = vector.broadcast %cst_7 : f32 to vector<8x512xf32>
    %12 = arith.mulf %10, %11 : vector<8x512xf32>
    %13 = math.roundeven %12 : vector<8x512xf32>
    %cst_8 = arith.constant 1.562500e-02 : f32
    %14 = vector.broadcast %cst_8 : f32 to vector<8x512xf32>
    %15 = arith.mulf %13, %14 : vector<8x512xf32>
    %cst_9 = arith.constant -2.000000e+00 : f32
    %cst_10 = arith.constant 1.984375 : f32
    %16 = vector.broadcast %cst_9 : f32 to vector<8x512xf32>
    %17 = arith.maximumf %16, %15 : vector<8x512xf32>
    %18 = vector.broadcast %cst_10 : f32 to vector<8x512xf32>
    %19 = arith.minimumf %18, %17 : vector<8x512xf32>
    %20 = arith.truncf %19 : vector<8x512xf32> to vector<8x512xbf16>
    %c0_11 = arith.constant 0 : index
    %c0_12 = arith.constant 0 : index
    %21 = vector.load %arg4[%c0_11, %c0_12] : memref<512x128xbf16, #tpu.memory_space<vmem>>, vector<512x128xbf16>
    %cst_13 = arith.constant dense<0.000000e+00> : vector<8x128xf32>
    %22 = tpu.matmul %20, %21, %cst_13 {dimension_numbers = #tpu.dot_dimension_numbers<[1], [0], [0], [1], [0, 0, 1, 1], [], []>} : vector<8x512xbf16>, vector<512x128xbf16>, vector<8x128xf32> -> vector<8x128xf32>
    %c0_14 = arith.constant 0 : index
    %c0_15 = arith.constant 0 : index
    %23 = vector.load %arg5[%c0_14, %c0_15] : memref<1x128xf32, #tpu.memory_space<vmem>>, vector<1x128xf32>
    %24 = vector.broadcast %23 : vector<1x128xf32> to vector<8x128xf32>
    %25 = arith.addf %22, %24 : vector<8x128xf32>
    %cst_16 = arith.constant dense<0xFF800000> : vector<8xf32>
    %26 = vector.multi_reduction <maximumf>, %25, %cst_16 [1] : vector<8x128xf32> to vector<8xf32>
    %27 = vector.shape_cast %26 : vector<8xf32> to vector<8x1xf32>
    %28 = vector.broadcast %27 : vector<8x1xf32> to vector<8x128xf32>
    %29 = arith.subf %25, %28 : vector<8x128xf32>
    %30 = math.exp %29 : vector<8x128xf32>
    %cst_17 = arith.constant dense<0.000000e+00> : vector<8xf32>
    %31 = vector.multi_reduction <add>, %30, %cst_17 [1] : vector<8x128xf32> to vector<8xf32>
    %32 = vector.shape_cast %31 : vector<8xf32> to vector<8x1xf32>
    %33 = math.log %32 : vector<8x1xf32>
    %34 = vector.broadcast %33 : vector<8x1xf32> to vector<8x128xf32>
    %35 = arith.subf %29, %34 : vector<8x128xf32>
    %c0_18 = arith.constant 0 : index
    %c0_19 = arith.constant 0 : index
    %36 = vector.load %arg6[%c0_18, %c0_19] : memref<8x128xf32, #tpu.memory_space<vmem>>, vector<8x128xf32>
    tpu.vector_store %arg6[%c0_18, %c0_19], %35 {strides = array<i32>} : memref<8x128xf32, #tpu.memory_space<vmem>>, vector<8x128xf32>,
    return
  }
  func.func @transform_0(%arg0: i32) -> (i32, i32) {
    %c0_i32 = arith.constant 0 : i32
    %c0_i32_0 = arith.constant 0 : i32
    return %arg0, %c0_i32 : i32, i32
  }
  func.func @transform_1(%arg0: i32) -> (i32, i32) {
    %c0_i32 = arith.constant 0 : i32
    %c0_i32_0 = arith.constant 0 : i32
    %c0_i32_1 = arith.constant 0 : i32
    return %c0_i32, %c0_i32_0 : i32, i32
  }
  func.func @transform_2(%arg0: i32) -> (i32, i32) {
    %c0_i32 = arith.constant 0 : i32
    %c0_i32_0 = arith.constant 0 : i32
    %c0_i32_1 = arith.constant 0 : i32
    return %c0_i32, %c0_i32_0 : i32, i32
  }
  func.func @transform_3(%arg0: i32) -> (i32, i32) {
    %c0_i32 = arith.constant 0 : i32
    %c0_i32_0 = arith.constant 0 : i32
    %c0_i32_1 = arith.constant 0 : i32
    return %c0_i32, %c0_i32_0 : i32, i32
  }
  func.func @transform_4(%arg0: i32) -> (i32, i32) {
    %c0_i32 = arith.constant 0 : i32
    %c0_i32_0 = arith.constant 0 : i32
    %c0_i32_1 = arith.constant 0 : i32
    return %c0_i32, %c0_i32_0 : i32, i32
  }
  func.func @transform_5(%arg0: i32) -> (i32, i32) {
    %c0_i32 = arith.constant 0 : i32
    %c0_i32_0 = arith.constant 0 : i32
    return %arg0, %c0_i32 : i32, i32
  }
}

</mosaic_0001>

<llo_original>
// kernel: tpu_custom_call.1
$region0: #{tpu_custom_call.1}
  #allocation0 [shape = 'u32[]', space=smem, size = 0x4, offset = 0x4, fixed_abs, tag = 'smem constant byte address 0x4 - core index']
  #allocation1 [shape = 'u32[144,128]{1,0:T(1,128)}', space=vmem, size = 0x12000, scoped, tag = 'internal scratch']
  %s0 = inlined_call_operand.hbm [shape: f32[8,256], index: 0, kind: input, shape index: {}]
  %s1 = inlined_call_operand.hbm [shape: bf16[256,512], index: 1, kind: input, shape index: {}]
  %s2 = inlined_call_operand.hbm [shape: f32[1,512], index: 2, kind: input, shape index: {}]
  %s3 = inlined_call_operand.hbm [shape: bf16[512,128], index: 3, kind: input, shape index: {}]
  %s4 = inlined_call_operand.vmem [shape: f32[1,128], index: 4, kind: input, shape index: {}]
  %s5 = inlined_call_operand.hbm [shape: f32[8,128], index: 5, kind: output, shape index: {}]
  %s6 = sld [smem:[#allocation0]]
  $region46: #{tpu_custom_call.1} parent=0
    _
  %s8 = ssub.s32 1, %s6
  %s9 = scalar_select 0, %s8, %s6
  $region1: #{tpu_custom_call.1} parent=0
    #allocation2 [shape = 'u8[8192]{0}', space=vmem, size = 0x2000, scoped, tag = 'input window, operand 0, single buffered']
    #allocation3 [shape = 's32[1]{0}', space=sflag, size = 0x4, scoped, tag = 'scoped memory for tpu_custom_call.1']
    #allocation4 [shape = 's32[1]{0}', space=sflag, size = 0x4, scoped, tag = 'scoped memory for tpu_custom_call.1']
    #allocation5 [shape = 'u8[262144]{0}', space=vmem, size = 0x40000, scoped, tag = 'input window, operand 1, single buffered']
    #allocation6 [shape = 's32[1]{0}', space=sflag, size = 0x4, scoped, tag = 'scoped memory for tpu_custom_call.1']
    #allocation7 [shape = 'u8[2048]{0}', space=vmem, size = 0x800, scoped, tag = 'input window, operand 2, single buffered']
    #allocation8 [shape = 'u8[131072]{0}', space=vmem, size = 0x20000, scoped, tag = 'input window, operand 3, single buffered']
    #allocation9 [shape = 's32[1]{0}', space=sflag, size = 0x4, scoped, tag = 'scoped memory for tpu_custom_call.1']
    #allocation10 [shape = 'u8[4096]{0}', space=vmem, size = 0x1000, scoped, tag = 'output window, operand 0, single buffered']
    %10 = vsyncpa [#allocation3], 0
    %11 = vsyncpa [#allocation6], 0
    %12 = vsyncpa [#allocation9], 0
    %13 = vsyncpa [#allocation4], 0
    // Predicated region
    $region2: #{tpu_custom_call.1} parent=1 // pred_check
      _
    $region3: #{tpu_custom_call.1} parent=1 // pred_check_branch
      %15 = sbr.rel (0) target = $region5
    $region4: #{tpu_custom_call.1} parent=1 // pred_region
      %s17 = ssub.s32 256, 256
      %18 = vsyncadd [#allocation3], %s17
      %s20 = sshll.u32 [#allocation2], 4
      %s21 = int_to_ptr.vmem [resolvable:$true] %s20
      %23 = dma.hbm_to_vmem [thread:$0]  %s0, 256, %s21, [#allocation3]
    $region5: #{tpu_custom_call.1} parent=1 // pred_fallthru
      _
    // Predicated region
    $region6: #{tpu_custom_call.1} parent=1 // pred_check
      _
    $region7: #{tpu_custom_call.1} parent=1 // pred_check_branch
      %25 = sbr.rel (0) target = $region9
    $region8: #{tpu_custom_call.1} parent=1 // pred_region
      %s27 = ssub.s32 8192, 8192
      %28 = vsyncadd [#allocation6], %s27
      %s29 = sshll.u32 [#allocation5], 4
      %s30 = int_to_ptr.vmem [resolvable:$true] %s29
      %35 = dma.hbm_to_vmem [thread:$0]  %s1, 8192, %s30, [#allocation6], 256, 256, 16
    $region9: #{tpu_custom_call.1} parent=1 // pred_fallthru
      _
    // Predicated region
    $region10: #{tpu_custom_call.1} parent=1 // pred_check
      _
    $region11: #{tpu_custom_call.1} parent=1 // pred_check_branch
      %37 = sbr.rel (0) target = $region13
    $region12: #{tpu_custom_call.1} parent=1 // pred_region
      %s39 = ssub.s32 64, 64
      %40 = vsyncadd [#allocation6], %s39
      %s42 = sshll.u32 [#allocation7], 4
      %s43 = int_to_ptr.vmem [resolvable:$true] %s42
      %45 = dma.hbm_to_vmem [thread:$0]  %s2, 64, %s43, [#allocation6]
    $region13: #{tpu_custom_call.1} parent=1 // pred_fallthru
      _
    // Predicated region
    $region14: #{tpu_custom_call.1} parent=1 // pred_check
      _
    $region15: #{tpu_custom_call.1} parent=1 // pred_check_branch
      %47 = sbr.rel (0) target = $region17
    $region16: #{tpu_custom_call.1} parent=1 // pred_region
      %s49 = ssub.s32 4096, 4096
      %50 = vsyncadd [#allocation9], %s49
      %s51 = sshll.u32 [#allocation8], 4
      %s52 = int_to_ptr.vmem [resolvable:$true] %s51
      %57 = dma.hbm_to_vmem [thread:$0]  %s3, 4096, %s52, [#allocation9], 64, 64, 4
    $region17: #{tpu_custom_call.1} parent=1 // pred_fallthru
      _
    // Predicated region
    $region18: #{tpu_custom_call.1} parent=1 // pred_check
      _
    $region19: #{tpu_custom_call.1} parent=1 // pred_check_branch
      %59 = sbr.rel (0) target = $region21
    $region20: #{tpu_custom_call.1} parent=1 // pred_region
      _
    $region21: #{tpu_custom_call.1} parent=1 // pred_fallthru
      _
    // Predicated region
    $region22: #{tpu_custom_call.1} parent=1 // pred_check
      _
    $region23: #{tpu_custom_call.1} parent=1 // pred_check_branch
      %61 = sbr.rel (0) target = $region25
    $region24: #{tpu_custom_call.1} parent=1 // pred_region
      %62 = dma.done [#allocation3], 256
    $region25: #{tpu_custom_call.1} parent=1 // pred_fallthru
      _
    // Predicated region
    $region26: #{tpu_custom_call.1} parent=1 // pred_check
      _
    $region27: #{tpu_custom_call.1} parent=1 // pred_check_branch
      %64 = sbr.rel (0) target = $region29
    $region28: #{tpu_custom_call.1} parent=1 // pred_region
      %65 = dma.done [#allocation6], 8192
    $region29: #{tpu_custom_call.1} parent=1 // pred_fallthru
      _
    // Predicated region
    $region30: #{tpu_custom_call.1} parent=1 // pred_check
      _
    $region31: #{tpu_custom_call.1} parent=1 // pred_check_branch
      %67 = sbr.rel (0) target = $region33
    $region32: #{tpu_custom_call.1} parent=1 // pred_region
      %68 = dma.done [#allocation6], 64
    $region33: #{tpu_custom_call.1} parent=1 // pred_fallthru
      _
    // Predicated region
    $region34: #{tpu_custom_call.1} parent=1 // pred_check
      _
    $region35: #{tpu_custom_call.1} parent=1 // pred_check_branch
      %70 = sbr.rel (0) target = $region37
    $region36: #{tpu_custom_call.1} parent=1 // pred_region
      %71 = dma.done [#allocation9], 4096
    $region37: #{tpu_custom_call.1} parent=1 // pred_fallthru
      _
    %v73 = vld [vmem:[#allocation2] sm:$0xff]
    %v74 = vld [vmem:[#allocation2 + $0x8] sm:$0xff]
    %v75 = vpack.c.bf16 %v73, %v73
    %v76 = vpack.c.bf16 %v74, %v74
    %v77 = vld [vmem:[#allocation5] sm:$0xff]
    %v78 = vld [vmem:[#allocation5 + $0x8] sm:$0xff]
    %v79 = vld [vmem:[#allocation5 + $0x10] sm:$0xff]
    %v80 = vld [vmem:[#allocation5 + $0x18] sm:$0xff]
    %v81 = vld [vmem:[#allocation5 + $0x20] sm:$0xff]
    %v82 = vld [vmem:[#allocation5 + $0x28] sm:$0xff]
    %v83 = vld [vmem:[#allocation5 + $0x30] sm:$0xff]
    %v84 = vld [vmem:[#allocation5 + $0x38] sm:$0xff]
    %v85 = vld [vmem:[#allocation5 + $0x40] sm:$0xff]
    %v86 = vld [vmem:[#allocation5 + $0x48] sm:$0xff]
    %v87 = vld [vmem:[#allocation5 + $0x50] sm:$0xff]
    %v88 = vld [vmem:[#allocation5 + $0x58] sm:$0xff]
    %v89 = vld [vmem:[#allocation5 + $0x60] sm:$0xff]
    %v90 = vld [vmem:[#allocation5 + $0x68] sm:$0xff]
    %v91 = vld [vmem:[#allocation5 + $0x70] sm:$0xff]
    %v92 = vld [vmem:[#allocation5 + $0x78] sm:$0xff]
    %v93 = vld [vmem:[#allocation5 + $0x80] sm:$0xff]
    %v94 = vld [vmem:[#allocation5 + $0x88] sm:$0xff]
    %v95 = vld [vmem:[#allocation5 + $0x90] sm:$0xff]
    %v96 = vld [vmem:[#allocation5 + $0x98] sm:$0xff]
    %v97 = vld [vmem:[#allocation5 + $0xa0] sm:$0xff]
    %v98 = vld [vmem:[#allocation5 + $0xa8] sm:$0xff]
    %v99 = vld [vmem:[#allocation5 + $0xb0] sm:$0xff]
    %v100 = vld [vmem:[#allocation5 + $0xb8] sm:$0xff]
    %v101 = vld [vmem:[#allocation5 + $0xc0] sm:$0xff]
    %v102 = vld [vmem:[#allocation5 + $0xc8] sm:$0xff]
    %v103 = vld [vmem:[#allocation5 + $0xd0] sm:$0xff]
    %v104 = vld [vmem:[#allocation5 + $0xd8] sm:$0xff]
    %v105 = vld [vmem:[#allocation5 + $0xe0] sm:$0xff]
    %v106 = vld [vmem:[#allocation5 + $0xe8] sm:$0xff]
    %v107 = vld [vmem:[#allocation5 + $0xf0] sm:$0xff]
    %v108 = vld [vmem:[#allocation5 + $0xf8] sm:$0xff]
    %v109 = vld [vmem:[#allocation5 + $0x100] sm:$0xff]
    %v110 = vld [vmem:[#allocation5 + $0x108] sm:$0xff]
    %v111 = vld [vmem:[#allocation5 + $0x110] sm:$0xff]
    %v112 = vld [vmem:[#allocation5 + $0x118] sm:$0xff]
    %v113 = vld [vmem:[#allocation5 + $0x120] sm:$0xff]
    %v114 = vld [vmem:[#allocation5 + $0x128] sm:$0xff]
    %v115 = vld [vmem:[#allocation5 + $0x130] sm:$0xff]
    %v116 = vld [vmem:[#allocation5 + $0x138] sm:$0xff]
    %v117 = vld [vmem:[#allocation5 + $0x140] sm:$0xff]
    %v118 = vld [vmem:[#allocation5 + $0x148] sm:$0xff]
    %v119 = vld [vmem:[#allocation5 + $0x150] sm:$0xff]
    %v120 = vld [vmem:[#allocation5 + $0x158] sm:$0xff]
    %v121 = vld [vmem:[#allocation5 + $0x160] sm:$0xff]
    %v122 = vld [vmem:[#allocation5 + $0x168] sm:$0xff]
    %v123 = vld [vmem:[#allocation5 + $0x170] sm:$0xff]
    %v124 = vld [vmem:[#allocation5 + $0x178] sm:$0xff]
    %v125 = vld [vmem:[#allocation5 + $0x180] sm:$0xff]
    %v126 = vld [vmem:[#allocation5 + $0x188] sm:$0xff]
    %v127 = vld [vmem:[#allocation5 + $0x190] sm:$0xff]
    %v128 = vld [vmem:[#allocation5 + $0x198] sm:$0xff]
    %v129 = vld [vmem:[#allocation5 + $0x1a0] sm:$0xff]
    %v130 = vld [vmem:[#allocation5 + $0x1a8] sm:$0xff]
    %v131 = vld [vmem:[#allocation5 + $0x1b0] sm:$0xff]
    %v132 = vld [vmem:[#allocation5 + $0x1b8] sm:$0xff]
    %v133 = vld [vmem:[#allocation5 + $0x1c0] sm:$0xff]
    %v134 = vld [vmem:[#allocation5 + $0x1c8] sm:$0xff]
    %v135 = vld [vmem:[#allocation5 + $0x1d0] sm:$0xff]
    %v136 = vld [vmem:[#allocation5 + $0x1d8] sm:$0xff]
    %v137 = vld [vmem:[#allocation5 + $0x1e0] sm:$0xff]
    %v138 = vld [vmem:[#allocation5 + $0x1e8] sm:$0xff]
    %v139 = vld [vmem:[#allocation5 + $0x1f0] sm:$0xff]
    %v140 = vld [vmem:[#allocation5 + $0x1f8] sm:$0xff]
    %v141 = vld [vmem:[#allocation7] sm:$0xf]
    %v143 = vlaneseq
    %v144 = vshrl.u32 %v143, 7
    %v145 = vsub.s32 0, %v144
    %v146 = vrot.slane %v141, %v145
    %v147 = vlaneseq
    %v148 = vshrl.u32 %v147, 7
    %v149 = vsub.s32 1, %v148
    %v150 = vrot.slane %v141, %v149
    %v151 = vlaneseq
    %v152 = vshrl.u32 %v151, 7
    %v153 = vsub.s32 2, %v152
    %v154 = vrot.slane %v141, %v153
    %v155 = vlaneseq
    %v156 = vshrl.u32 %v155, 7
    %v157 = vsub.s32 3, %v156
    %v158 = vrot.slane %v141, %v157
    %v227 = vunpack.c.l.b16 %v77
    %v228 = vunpack.c.h.b16 %v77
    %v229 = vunpack.c.l.b16 %v78
    %v230 = vunpack.c.h.b16 %v78
    %v231 = vunpack.c.l.b16 %v79
    %v232 = vunpack.c.h.b16 %v79
    %v233 = vunpack.c.l.b16 %v80
    %v234 = vunpack.c.h.b16 %v80
    %v235 = vunpack.c.l.b16 %v81
    %v236 = vunpack.c.h.b16 %v81
    %v237 = vunpack.c.l.b16 %v82
    %v238 = vunpack.c.h.b16 %v82
    %v239 = vunpack.c.l.b16 %v83
    %v240 = vunpack.c.h.b16 %v83
    %v241 = vunpack.c.l.b16 %v84
    %v242 = vunpack.c.h.b16 %v84
    %v243 = vunpack.c.l.b16 %v85
    %v244 = vunpack.c.h.b16 %v85
    %v245 = vunpack.c.l.b16 %v86
    %v246 = vunpack.c.h.b16 %v86
    %v247 = vunpack.c.l.b16 %v87
    %v248 = vunpack.c.h.b16 %v87
    %v249 = vunpack.c.l.b16 %v88
    %v250 = vunpack.c.h.b16 %v88
    %v251 = vunpack.c.l.b16 %v89
    %v252 = vunpack.c.h.b16 %v89
    %v253 = vunpack.c.l.b16 %v90
    %v254 = vunpack.c.h.b16 %v90
    %v255 = vunpack.c.l.b16 %v91
    %v256 = vunpack.c.h.b16 %v91
    %v257 = vunpack.c.l.b16 %v92
    %v258 = vunpack.c.h.b16 %v92
    %v259 = vunpack.c.l.b16 %v93
    %v260 = vunpack.c.h.b16 %v93
    %v261 = vunpack.c.l.b16 %v94
    %v262 = vunpack.c.h.b16 %v94
    %v263 = vunpack.c.l.b16 %v95
    %v264 = vunpack.c.h.b16 %v95
    %v265 = vunpack.c.l.b16 %v96
    %v266 = vunpack.c.h.b16 %v96
    %v267 = vunpack.c.l.b16 %v97
    %v268 = vunpack.c.h.b16 %v97
    %v269 = vunpack.c.l.b16 %v98
    %v270 = vunpack.c.h.b16 %v98
    %v271 = vunpack.c.l.b16 %v99
    %v272 = vunpack.c.h.b16 %v99
    %v273 = vunpack.c.l.b16 %v100
    %v274 = vunpack.c.h.b16 %v100
    %v275 = vunpack.c.l.b16 %v101
    %v276 = vunpack.c.h.b16 %v101
    %v277 = vunpack.c.l.b16 %v102
    %v278 = vunpack.c.h.b16 %v102
    %v279 = vunpack.c.l.b16 %v103
    %v280 = vunpack.c.h.b16 %v103
    %v281 = vunpack.c.l.b16 %v104
    %v282 = vunpack.c.h.b16 %v104
    %v283 = vunpack.c.l.b16 %v105
    %v284 = vunpack.c.h.b16 %v105
    %v285 = vunpack.c.l.b16 %v106
    %v286 = vunpack.c.h.b16 %v106
    %v287 = vunpack.c.l.b16 %v107
    %v288 = vunpack.c.h.b16 %v107
    %v289 = vunpack.c.l.b16 %v108
    %v290 = vunpack.c.h.b16 %v108
    %v291 = vunpack.c.l.b16 %v109
    %v292 = vunpack.c.h.b16 %v109
    %v293 = vunpack.c.l.b16 %v110
    %v294 = vunpack.c.h.b16 %v110
    %v295 = vunpack.c.l.b16 %v111
    %v296 = vunpack.c.h.b16 %v111
    %v297 = vunpack.c.l.b16 %v112
    %v298 = vunpack.c.h.b16 %v112
    %v299 = vunpack.c.l.b16 %v113
    %v300 = vunpack.c.h.b16 %v113
    %v301 = vunpack.c.l.b16 %v114
    %v302 = vunpack.c.h.b16 %v114
    %v303 = vunpack.c.l.b16 %v115
    %v304 = vunpack.c.h.b16 %v115
    %v305 = vunpack.c.l.b16 %v116
    %v306 = vunpack.c.h.b16 %v116
    %v307 = vunpack.c.l.b16 %v117
    %v308 = vunpack.c.h.b16 %v117
    %v309 = vunpack.c.l.b16 %v118
    %v310 = vunpack.c.h.b16 %v118
    %v311 = vunpack.c.l.b16 %v119
    %v312 = vunpack.c.h.b16 %v119
    %v313 = vunpack.c.l.b16 %v120
    %v314 = vunpack.c.h.b16 %v120
    %v315 = vunpack.c.l.b16 %v121
    %v316 = vunpack.c.h.b16 %v121
    %v317 = vunpack.c.l.b16 %v122
    %v318 = vunpack.c.h.b16 %v122
    %v319 = vunpack.c.l.b16 %v123
    %v320 = vunpack.c.h.b16 %v123
    %v321 = vunpack.c.l.b16 %v124
    %v322 = vunpack.c.h.b16 %v124
    %v323 = vunpack.c.l.b16 %v125
    %v324 = vunpack.c.h.b16 %v125
    %v325 = vunpack.c.l.b16 %v126
    %v326 = vunpack.c.h.b16 %v126
    %v327 = vunpack.c.l.b16 %v127
    %v328 = vunpack.c.h.b16 %v127
    %v329 = vunpack.c.l.b16 %v128
    %v330 = vunpack.c.h.b16 %v128
    %v331 = vunpack.c.l.b16 %v129
    %v332 = vunpack.c.h.b16 %v129
    %v333 = vunpack.c.l.b16 %v130
    %v334 = vunpack.c.h.b16 %v130
    %v335 = vunpack.c.l.b16 %v131
    %v336 = vunpack.c.h.b16 %v131
    %v337 = vunpack.c.l.b16 %v132
    %v338 = vunpack.c.h.b16 %v132
    %v339 = vunpack.c.l.b16 %v133
    %v340 = vunpack.c.h.b16 %v133
    %v341 = vunpack.c.l.b16 %v134
    %v342 = vunpack.c.h.b16 %v134
    %v343 = vunpack.c.l.b16 %v135
    %v344 = vunpack.c.h.b16 %v135
    %v345 = vunpack.c.l.b16 %v136
    %v346 = vunpack.c.h.b16 %v136
    %v347 = vunpack.c.l.b16 %v137
    %v348 = vunpack.c.h.b16 %v137
    %v349 = vunpack.c.l.b16 %v138
    %v350 = vunpack.c.h.b16 %v138
    %v351 = vunpack.c.l.b16 %v139
    %v352 = vunpack.c.h.b16 %v139
    %v353 = vunpack.c.l.b16 %v140
    %v354 = vunpack.c.h.b16 %v140
    %v355 = vpack.c.b16 %v231, %v227
    %v356 = vpack.c.b16 %v232, %v228
    %v357 = vpack.c.b16 %v233, %v229
    %v358 = vpack.c.b16 %v234, %v230
    %v359 = vpack.c.b16 %v239, %v235
    %v360 = vpack.c.b16 %v240, %v236
    %v361 = vpack.c.b16 %v241, %v237
    %v362 = vpack.c.b16 %v242, %v238
    %v363 = vpack.c.b16 %v247, %v243
    %v364 = vpack.c.b16 %v248, %v244
    %v365 = vpack.c.b16 %v249, %v245
    %v366 = vpack.c.b16 %v250, %v246
    %v367 = vpack.c.b16 %v255, %v251
    %v368 = vpack.c.b16 %v256, %v252
    %v369 = vpack.c.b16 %v257, %v253
    %v370 = vpack.c.b16 %v258, %v254
    %v371 = vpack.c.b16 %v263, %v259
    %v372 = vpack.c.b16 %v264, %v260
    %v373 = vpack.c.b16 %v265, %v261
    %v374 = vpack.c.b16 %v266, %v262
    %v375 = vpack.c.b16 %v271, %v267
    %v376 = vpack.c.b16 %v272, %v268
    %v377 = vpack.c.b16 %v273, %v269
    %v378 = vpack.c.b16 %v274, %v270
    %v379 = vpack.c.b16 %v279, %v275
    %v380 = vpack.c.b16 %v280, %v276
    %v381 = vpack.c.b16 %v281, %v277
    %v382 = vpack.c.b16 %v282, %v278
    %v383 = vpack.c.b16 %v287, %v283
    %v384 = vpack.c.b16 %v288, %v284
    %v385 = vpack.c.b16 %v289, %v285
    %v386 = vpack.c.b16 %v290, %v286
    %v387 = vpack.c.b16 %v295, %v291
    %v388 = vpack.c.b16 %v296, %v292
    %v389 = vpack.c.b16 %v297, %v293
    %v390 = vpack.c.b16 %v298, %v294
    %v391 = vpack.c.b16 %v303, %v299
    %v392 = vpack.c.b16 %v304, %v300
    %v393 = vpack.c.b16 %v305, %v301
    %v394 = vpack.c.b16 %v306, %v302
    %v395 = vpack.c.b16 %v311, %v307
    %v396 = vpack.c.b16 %v312, %v308
    %v397 = vpack.c.b16 %v313, %v309
    %v398 = vpack.c.b16 %v314, %v310
    %v399 = vpack.c.b16 %v319, %v315
    %v400 = vpack.c.b16 %v320, %v316
    %v401 = vpack.c.b16 %v321, %v317
    %v402 = vpack.c.b16 %v322, %v318
    %v403 = vpack.c.b16 %v327, %v323
    %v404 = vpack.c.b16 %v328, %v324
    %v405 = vpack.c.b16 %v329, %v325
    %v406 = vpack.c.b16 %v330, %v326
    %v407 = vpack.c.b16 %v335, %v331
    %v408 = vpack.c.b16 %v336, %v332
    %v409 = vpack.c.b16 %v337, %v333
    %v410 = vpack.c.b16 %v338, %v334
    %v411 = vpack.c.b16 %v343, %v339
    %v412 = vpack.c.b16 %v344, %v340
    %v413 = vpack.c.b16 %v345, %v341
    %v414 = vpack.c.b16 %v346, %v342
    %v415 = vpack.c.b16 %v351, %v347
    %v416 = vpack.c.b16 %v352, %v348
    %v417 = vpack.c.b16 %v353, %v349
    %v418 = vpack.c.b16 %v354, %v350
    %483 = vmatprep.subr.bf16.mxu0 %v384
    %484 = vmatpush1.bf16.msra.mxu0 %v383
    %485 = vmatprep.subr.bf16.mxu0 %v380
    %486 = vmatpush1.bf16.msra.mxu0 %v379
    %487 = vmatprep.subr.bf16.mxu0 %v376
    %488 = vmatpush1.bf16.msra.mxu0 %v375
    %489 = vmatprep.subr.bf16.mxu0 %v372
    %490 = vmatpush1.bf16.msra.mxu0 %v371
    %491 = vmatprep.subr.bf16.mxu0 %v368
    %492 = vmatpush1.bf16.msra.mxu0 %v367
    %493 = vmatprep.subr.bf16.mxu0 %v364
    %494 = vmatpush1.bf16.msra.mxu0 %v363
    %495 = vmatprep.subr.bf16.mxu0 %v360
    %496 = vmatpush1.bf16.msra.mxu0 %v359
    %497 = vmatprep.subr.bf16.mxu0 %v356
    %498 = vmatpush1.bf16.msra.mxu0 %v355
    %499 = vmatprep.subr.bf16.mxu0 %v416
    %500 = vmatpush2.bf16.msra.mxu0 %v415
    %501 = vmatprep.subr.bf16.mxu0 %v412
    %502 = vmatpush2.bf16.msra.mxu0 %v411
    %503 = vmatprep.subr.bf16.mxu0 %v408
    %504 = vmatpush2.bf16.msra.mxu0 %v407
    %505 = vmatprep.subr.bf16.mxu0 %v404
    %506 = vmatpush2.bf16.msra.mxu0 %v403
    %507 = vmatprep.subr.bf16.mxu0 %v400
    %508 = vmatpush2.bf16.msra.mxu0 %v399
    %509 = vmatprep.subr.bf16.mxu0 %v396
    %510 = vmatpush2.bf16.msra.mxu0 %v395
    %511 = vmatprep.subr.bf16.mxu0 %v392
    %512 = vmatpush2.bf16.msra.mxu0 %v391
    %513 = vmatprep.subr.bf16.mxu0 %v388
    %514 = vmatpush2.bf16.msra.mxu0 %v387
    %515 = vmatprep.mubr.bf16.mxu0 %v76
    %516 = vmatmul.mubr.bf16.gmra.mxu0 %v75
    %v517 = vpop.f32.mrf.mxu0
    %v518 = vadd.f32 %v146, %v517
    %v519 = vpop.f32.mrf.mxu0
    %v520 = vadd.f32 %v150, %v519
    %v521 = vpop.f32.mrf.mxu0
    %v522 = vpop.f32.mrf.mxu0
    %523 = vdwg.mxu0
    %524 = vmatprep.subr.bf16.mxu0 %v386
    %525 = vmatpush1.bf16.msra.mxu0 %v385
    %526 = vmatprep.subr.bf16.mxu0 %v382
    %527 = vmatpush1.bf16.msra.mxu0 %v381
    %528 = vmatprep.subr.bf16.mxu0 %v378
    %529 = vmatpush1.bf16.msra.mxu0 %v377
    %530 = vmatprep.subr.bf16.mxu0 %v374
    %531 = vmatpush1.bf16.msra.mxu0 %v373
    %532 = vmatprep.subr.bf16.mxu0 %v370
    %533 = vmatpush1.bf16.msra.mxu0 %v369
    %534 = vmatprep.subr.bf16.mxu0 %v366
    %535 = vmatpush1.bf16.msra.mxu0 %v365
    %536 = vmatprep.subr.bf16.mxu0 %v362
    %537 = vmatpush1.bf16.msra.mxu0 %v361
    %538 = vmatprep.subr.bf16.mxu0 %v358
    %539 = vmatpush1.bf16.msra.mxu0 %v357
    %540 = vmatprep.subr.bf16.mxu0 %v418
    %541 = vmatpush2.bf16.msra.mxu0 %v417
    %542 = vmatprep.subr.bf16.mxu0 %v414
    %543 = vmatpush2.bf16.msra.mxu0 %v413
    %544 = vmatprep.subr.bf16.mxu0 %v410
    %545 = vmatpush2.bf16.msra.mxu0 %v409
    %546 = vmatprep.subr.bf16.mxu0 %v406
    %547 = vmatpush2.bf16.msra.mxu0 %v405
    %548 = vmatprep.subr.bf16.mxu0 %v402
    %549 = vmatpush2.bf16.msra.mxu0 %v401
    %550 = vmatprep.subr.bf16.mxu0 %v398
    %551 = vmatpush2.bf16.msra.mxu0 %v397
    %552 = vmatprep.subr.bf16.mxu0 %v394
    %553 = vmatpush2.bf16.msra.mxu0 %v393
    %554 = vmatprep.subr.bf16.mxu0 %v390
    %555 = vmatpush2.bf16.msra.mxu0 %v389
    %556 = vmatprep.mubr.bf16.mxu0 %v76
    %557 = vmatmul.mubr.bf16.gmra.mxu0 %v75
    %v558 = vpop.f32.mrf.mxu0
    %v559 = vadd.f32 %v154, %v558
    %v560 = vpop.f32.mrf.mxu0
    %v561 = vadd.f32 %v158, %v560
    %v562 = vpop.f32.mrf.mxu0
    %v563 = vpop.f32.mrf.mxu0
    %564 = vdwg.mxu0
    %v565 = vmax.f32 %v518, 0.0
    %v566 = vmax.f32 %v520, 0.0
    %v567 = vmax.f32 %v559, 0.0
    %v568 = vmax.f32 %v561, 0.0
    %v569 = vmul.f32 %v565, 0.1
    %v570 = vmul.f32 %v566, 0.1
    %v571 = vmul.f32 %v567, 0.1
    %v572 = vmul.f32 %v568, 0.1
    %v573 = vmul.f32 %v569, 64.0
    %v574 = vmul.f32 %v570, 64.0
    %v575 = vmul.f32 %v571, 64.0
    %v576 = vmul.f32 %v572, 64.0
    %v577 = vround.ne.pseudo %v573
    %v578 = vround.ne.pseudo %v574
    %v579 = vround.ne.pseudo %v575
    %v580 = vround.ne.pseudo %v576
    %v581 = vmul.f32 %v577, 0.015625
    %v582 = vmul.f32 %v578, 0.015625
    %v583 = vmul.f32 %v579, 0.015625
    %v584 = vmul.f32 %v580, 0.015625
    %v585 = vmax.f32 %v581, -2.0
    %v586 = vmax.f32 %v582, -2.0
    %v587 = vmax.f32 %v583, -2.0
    %v588 = vmax.f32 %v584, -2.0
    %v589 = vmin.f32 %v585, 1.984375
    %v590 = vmin.f32 %v586, 1.984375
    %v591 = vmin.f32 %v587, 1.984375
    %v592 = vmin.f32 %v588, 1.984375
    %v593 = vpack.c.bf16 %v589, %v589
    %v594 = vpack.c.bf16 %v590, %v590
    %v595 = vpack.c.bf16 %v591, %v591
    %v596 = vpack.c.bf16 %v592, %v592
    %v597 = vld [vmem:[#allocation8] sm:$0xf]
    %v598 = vld [vmem:[#allocation8 + $0x4] sm:$0xf]
    %v599 = vld [vmem:[#allocation8 + $0x8] sm:$0xf]
    %v600 = vld [vmem:[#allocation8 + $0xc] sm:$0xf]
    %v601 = vld [vmem:[#allocation8 + $0x10] sm:$0xf]
    %v602 = vld [vmem:[#allocation8 + $0x14] sm:$0xf]
    %v603 = vld [vmem:[#allocation8 + $0x18] sm:$0xf]
    %v604 = vld [vmem:[#allocation8 + $0x1c] sm:$0xf]
    %v605 = vld [vmem:[#allocation8 + $0x20] sm:$0xf]
    %v606 = vld [vmem:[#allocation8 + $0x24] sm:$0xf]
    %v607 = vld [vmem:[#allocation8 + $0x28] sm:$0xf]
    %v608 = vld [vmem:[#allocation8 + $0x2c] sm:$0xf]
    %v609 = vld [vmem:[#allocation8 + $0x30] sm:$0xf]
    %v610 = vld [vmem:[#allocation8 + $0x34] sm:$0xf]
    %v611 = vld [vmem:[#allocation8 + $0x38] sm:$0xf]
    %v612 = vld [vmem:[#allocation8 + $0x3c] sm:$0xf]
    %v613 = vld [vmem:[#allocation8 + $0x40] sm:$0xf]
    %v614 = vld [vmem:[#allocation8 + $0x44] sm:$0xf]
    %v615 = vld [vmem:[#allocation8 + $0x48] sm:$0xf]
    %v616 = vld [vmem:[#allocation8 + $0x4c] sm:$0xf]
    %v617 = vld [vmem:[#allocation8 + $0x50] sm:$0xf]
    %v618 = vld [vmem:[#allocation8 + $0x54] sm:$0xf]
    %v619 = vld [vmem:[#allocation8 + $0x58] sm:$0xf]
    %v620 = vld [vmem:[#allocation8 + $0x5c] sm:$0xf]
    %v621 = vld [vmem:[#allocation8 + $0x60] sm:$0xf]
    %v622 = vld [vmem:[#allocation8 + $0x64] sm:$0xf]
    %v623 = vld [vmem:[#allocation8 + $0x68] sm:$0xf]
    %v624 = vld [vmem:[#allocation8 + $0x6c] sm:$0xf]
    %v625 = vld [vmem:[#allocation8 + $0x70] sm:$0xf]
    %v626 = vld [vmem:[#allocation8 + $0x74] sm:$0xf]
    %v627 = vld [vmem:[#allocation8 + $0x78] sm:$0xf]
    %v628 = vld [vmem:[#allocation8 + $0x7c] sm:$0xf]
    %v629 = vld [vmem:[#allocation8 + $0x80] sm:$0xf]
    %v630 = vld [vmem:[#allocation8 + $0x84] sm:$0xf]
    %v631 = vld [vmem:[#allocation8 + $0x88] sm:$0xf]
    %v632 = vld [vmem:[#allocation8 + $0x8c] sm:$0xf]
    %v633 = vld [vmem:[#allocation8 + $0x90] sm:$0xf]
    %v634 = vld [vmem:[#allocation8 + $0x94] sm:$0xf]
    %v635 = vld [vmem:[#allocation8 + $0x98] sm:$0xf]
    %v636 = vld [vmem:[#allocation8 + $0x9c] sm:$0xf]
    %v637 = vld [vmem:[#allocation8 + $0xa0] sm:$0xf]
    %v638 = vld [vmem:[#allocation8 + $0xa4] sm:$0xf]
    %v639 = vld [vmem:[#allocation8 + $0xa8] sm:$0xf]
    %v640 = vld [vmem:[#allocation8 + $0xac] sm:$0xf]
    %v641 = vld [vmem:[#allocation8 + $0xb0] sm:$0xf]
    %v642 = vld [vmem:[#allocation8 + $0xb4] sm:$0xf]
    %v643 = vld [vmem:[#allocation8 + $0xb8] sm:$0xf]
    %v644 = vld [vmem:[#allocation8 + $0xbc] sm:$0xf]
    %v645 = vld [vmem:[#allocation8 + $0xc0] sm:$0xf]
    %v646 = vld [vmem:[#allocation8 + $0xc4] sm:$0xf]
    %v647 = vld [vmem:[#allocation8 + $0xc8] sm:$0xf]
    %v648 = vld [vmem:[#allocation8 + $0xcc] sm:$0xf]
    %v649 = vld [vmem:[#allocation8 + $0xd0] sm:$0xf]
    %v650 = vld [vmem:[#allocation8 + $0xd4] sm:$0xf]
    %v651 = vld [vmem:[#allocation8 + $0xd8] sm:$0xf]
    %v652 = vld [vmem:[#allocation8 + $0xdc] sm:$0xf]
    %v653 = vld [vmem:[#allocation8 + $0xe0] sm:$0xf]
    %v654 = vld [vmem:[#allocation8 + $0xe4] sm:$0xf]
    %v655 = vld [vmem:[#allocation8 + $0xe8] sm:$0xf]
    %v656 = vld [vmem:[#allocation8 + $0xec] sm:$0xf]
    %v657 = vld [vmem:[#allocation8 + $0xf0] sm:$0xf]
    %v658 = vld [vmem:[#allocation8 + $0xf4] sm:$0xf]
    %v659 = vld [vmem:[#allocation8 + $0xf8] sm:$0xf]
    %v660 = vld [vmem:[#allocation8 + $0xfc] sm:$0xf]
    %v661 = vld [vmem:[%s4] sm:$0x1]
    %v663 = vlaneseq
    %v664 = vshrl.u32 %v663, 7
    %v665 = vsub.s32 0, %v664
    %v666 = vrot.slane %v661, %v665
    %v732 = vunpack.c.l.b16 %v597
    %v733 = vunpack.c.l.b16 %v598
    %v734 = vunpack.c.l.b16 %v599
    %v735 = vunpack.c.l.b16 %v600
    %v736 = vunpack.c.l.b16 %v601
    %v737 = vunpack.c.l.b16 %v602
    %v738 = vunpack.c.l.b16 %v603
    %v739 = vunpack.c.l.b16 %v604
    %v740 = vunpack.c.l.b16 %v605
    %v741 = vunpack.c.l.b16 %v606
    %v742 = vunpack.c.l.b16 %v607
    %v743 = vunpack.c.l.b16 %v608
    %v744 = vunpack.c.l.b16 %v609
    %v745 = vunpack.c.l.b16 %v610
    %v746 = vunpack.c.l.b16 %v611
    %v747 = vunpack.c.l.b16 %v612
    %v748 = vunpack.c.l.b16 %v613
    %v749 = vunpack.c.l.b16 %v614
    %v750 = vunpack.c.l.b16 %v615
    %v751 = vunpack.c.l.b16 %v616
    %v752 = vunpack.c.l.b16 %v617
    %v753 = vunpack.c.l.b16 %v618
    %v754 = vunpack.c.l.b16 %v619
    %v755 = vunpack.c.l.b16 %v620
    %v756 = vunpack.c.l.b16 %v621
    %v757 = vunpack.c.l.b16 %v622
    %v758 = vunpack.c.l.b16 %v623
    %v759 = vunpack.c.l.b16 %v624
    %v760 = vunpack.c.l.b16 %v625
    %v761 = vunpack.c.l.b16 %v626
    %v762 = vunpack.c.l.b16 %v627
    %v763 = vunpack.c.l.b16 %v628
    %v764 = vunpack.c.l.b16 %v629
    %v765 = vunpack.c.l.b16 %v630
    %v766 = vunpack.c.l.b16 %v631
    %v767 = vunpack.c.l.b16 %v632
    %v768 = vunpack.c.l.b16 %v633
    %v769 = vunpack.c.l.b16 %v634
    %v770 = vunpack.c.l.b16 %v635
    %v771 = vunpack.c.l.b16 %v636
    %v772 = vunpack.c.l.b16 %v637
    %v773 = vunpack.c.l.b16 %v638
    %v774 = vunpack.c.l.b16 %v639
    %v775 = vunpack.c.l.b16 %v640
    %v776 = vunpack.c.l.b16 %v641
    %v777 = vunpack.c.l.b16 %v642
    %v778 = vunpack.c.l.b16 %v643
    %v779 = vunpack.c.l.b16 %v644
    %v780 = vunpack.c.l.b16 %v645
    %v781 = vunpack.c.l.b16 %v646
    %v782 = vunpack.c.l.b16 %v647
    %v783 = vunpack.c.l.b16 %v648
    %v784 = vunpack.c.l.b16 %v649
    %v785 = vunpack.c.l.b16 %v650
    %v786 = vunpack.c.l.b16 %v651
    %v787 = vunpack.c.l.b16 %v652
    %v788 = vunpack.c.l.b16 %v653
    %v789 = vunpack.c.l.b16 %v654
    %v790 = vunpack.c.l.b16 %v655
    %v791 = vunpack.c.l.b16 %v656
    %v792 = vunpack.c.l.b16 %v657
    %v793 = vunpack.c.l.b16 %v658
    %v794 = vunpack.c.l.b16 %v659
    %v795 = vunpack.c.l.b16 %v660
    %v796 = vpack.c.b16 %v733, %v732
    %v797 = vpack.c.b16 %v735, %v734
    %v798 = vpack.c.b16 %v737, %v736
    %v799 = vpack.c.b16 %v739, %v738
    %v800 = vpack.c.b16 %v741, %v740
    %v801 = vpack.c.b16 %v743, %v742
    %v802 = vpack.c.b16 %v745, %v744
    %v803 = vpack.c.b16 %v747, %v746
    %v804 = vpack.c.b16 %v749, %v748
    %v805 = vpack.c.b16 %v751, %v750
    %v806 = vpack.c.b16 %v753, %v752
    %v807 = vpack.c.b16 %v755, %v754
    %v808 = vpack.c.b16 %v757, %v756
    %v809 = vpack.c.b16 %v759, %v758
    %v810 = vpack.c.b16 %v761, %v760
    %v811 = vpack.c.b16 %v763, %v762
    %v812 = vpack.c.b16 %v765, %v764
    %v813 = vpack.c.b16 %v767, %v766
    %v814 = vpack.c.b16 %v769, %v768
    %v815 = vpack.c.b16 %v771, %v770
    %v816 = vpack.c.b16 %v773, %v772
    %v817 = vpack.c.b16 %v775, %v774
    %v818 = vpack.c.b16 %v777, %v776
    %v819 = vpack.c.b16 %v779, %v778
    %v820 = vpack.c.b16 %v781, %v780
    %v821 = vpack.c.b16 %v783, %v782
    %v822 = vpack.c.b16 %v785, %v784
    %v823 = vpack.c.b16 %v787, %v786
    %v824 = vpack.c.b16 %v789, %v788
    %v825 = vpack.c.b16 %v791, %v790
    %v826 = vpack.c.b16 %v793, %v792
    %v827 = vpack.c.b16 %v795, %v794
    %860 = vmatprep.subr.bf16.mxu0 0
    %861 = vmatpush1.bf16.msra.mxu0 %v803
    %862 = vmatprep.subr.bf16.mxu0 0
    %863 = vmatpush1.bf16.msra.mxu0 %v802
    %864 = vmatprep.subr.bf16.mxu0 0
    %865 = vmatpush1.bf16.msra.mxu0 %v801
    %866 = vmatprep.subr.bf16.mxu0 0
    %867 = vmatpush1.bf16.msra.mxu0 %v800
    %868 = vmatprep.subr.bf16.mxu0 0
    %869 = vmatpush1.bf16.msra.mxu0 %v799
    %870 = vmatprep.subr.bf16.mxu0 0
    %871 = vmatpush1.bf16.msra.mxu0 %v798
    %872 = vmatprep.subr.bf16.mxu0 0
    %873 = vmatpush1.bf16.msra.mxu0 %v797
    %874 = vmatprep.subr.bf16.mxu0 0
    %875 = vmatpush1.bf16.msra.mxu0 %v796
    %876 = vmatprep.subr.bf16.mxu0 0
    %877 = vmatpush2.bf16.msra.mxu0 %v811
    %878 = vmatprep.subr.bf16.mxu0 0
    %879 = vmatpush2.bf16.msra.mxu0 %v810
    %880 = vmatprep.subr.bf16.mxu0 0
    %881 = vmatpush2.bf16.msra.mxu0 %v809
    %882 = vmatprep.subr.bf16.mxu0 0
    %883 = vmatpush2.bf16.msra.mxu0 %v808
    %884 = vmatprep.subr.bf16.mxu0 0
    %885 = vmatpush2.bf16.msra.mxu0 %v807
    %886 = vmatprep.subr.bf16.mxu0 0
    %887 = vmatpush2.bf16.msra.mxu0 %v806
    %888 = vmatprep.subr.bf16.mxu0 0
    %889 = vmatpush2.bf16.msra.mxu0 %v805
    %890 = vmatprep.subr.bf16.mxu0 0
    %891 = vmatpush2.bf16.msra.mxu0 %v804
    %892 = vmatprep.mubr.bf16.mxu0 %v594
    %893 = vmatmul.mubr.bf16.gmra.mxu0 %v593
    %v894 = vpop.f32.mrf.mxu0
    %v895 = vadd.f32 %v666, %v894
    %v896 = vpop.f32.mrf.mxu0
    %v897 = vpop.f32.mrf.mxu0
    %v898 = vpop.f32.mrf.mxu0
    %899 = vdwg.mxu0
    %900 = vmatprep.subr.bf16.mxu0 0
    %901 = vmatpush1.bf16.msra.mxu0 %v819
    %902 = vmatprep.subr.bf16.mxu0 0
    %903 = vmatpush1.bf16.msra.mxu0 %v818
    %904 = vmatprep.subr.bf16.mxu0 0
    %905 = vmatpush1.bf16.msra.mxu0 %v817
    %906 = vmatprep.subr.bf16.mxu0 0
    %907 = vmatpush1.bf16.msra.mxu0 %v816
    %908 = vmatprep.subr.bf16.mxu0 0
    %909 = vmatpush1.bf16.msra.mxu0 %v815
    %910 = vmatprep.subr.bf16.mxu0 0
    %911 = vmatpush1.bf16.msra.mxu0 %v814
    %912 = vmatprep.subr.bf16.mxu0 0
    %913 = vmatpush1.bf16.msra.mxu0 %v813
    %914 = vmatprep.subr.bf16.mxu0 0
    %915 = vmatpush1.bf16.msra.mxu0 %v812
    %916 = vmatprep.subr.bf16.mxu0 0
    %917 = vmatpush2.bf16.msra.mxu0 %v827
    %918 = vmatprep.subr.bf16.mxu0 0
    %919 = vmatpush2.bf16.msra.mxu0 %v826
    %920 = vmatprep.subr.bf16.mxu0 0
    %921 = vmatpush2.bf16.msra.mxu0 %v825
    %922 = vmatprep.subr.bf16.mxu0 0
    %923 = vmatpush2.bf16.msra.mxu0 %v824
    %924 = vmatprep.subr.bf16.mxu0 0
    %925 = vmatpush2.bf16.msra.mxu0 %v823
    %926 = vmatprep.subr.bf16.mxu0 0
    %927 = vmatpush2.bf16.msra.mxu0 %v822
    %928 = vmatprep.subr.bf16.mxu0 0
    %929 = vmatpush2.bf16.msra.mxu0 %v821
    %930 = vmatprep.subr.bf16.mxu0 0
    %931 = vmatpush2.bf16.msra.mxu0 %v820
    %932 = vmatprep.mubr.bf16.mxu0 %v596
    %933 = vmatmul.mubr.bf16.gmra.mxu0 %v595
    %v934 = vpop.f32.mrf.mxu0
    %v935 = vadd.f32 %v895, %v934
    %v936 = vpop.f32.mrf.mxu0
    %v937 = vpop.f32.mrf.mxu0
    %v938 = vpop.f32.mrf.mxu0
    %939 = vdwg.mxu0
    %940 = vmax.xlane.f32.xlu0 %v935
    %v941 = vpop.xlane.xlu0 %940
    %v942 = vsub.f32 %v935, %v941
    %v943 = vmul.f32 %v942, 1.442695
    %v944 = vpow.pop %v943
    %945 = vadd.xlane.f32.xlu0 %v944
    %v946 = vpop.xlane.xlu0 %945
    %v947 = vlog2.pop %v946
    %v948 = vmul.f32 %v947, 0.6931472
    %v949 = vsub.f32 %v942, %v948
    %950 = vst [vmem:[#allocation10] sm:$0xff] %v949
    // Predicated region
    $region38: #{tpu_custom_call.1} parent=1 // pred_check
      _
    $region39: #{tpu_custom_call.1} parent=1 // pred_check_branch
      %952 = sbr.rel (0) target = $region41
    $region40: #{tpu_custom_call.1} parent=1 // pred_region
      %s954 = ssub.s32 128, 128
      %955 = vsyncadd [#allocation4], %s954
      %s957 = sshll.u32 [#allocation10], 4
      %s958 = int_to_ptr.vmem [resolvable:$true] %s957
      %960 = dma.vmem_to_hbm [thread:$0]  %s958, 128, %s5, [#allocation4]
    $region41: #{tpu_custom_call.1} parent=1 // pred_fallthru
      _
    // Predicated region
    $region42: #{tpu_custom_call.1} parent=1 // pred_check
      _
    $region43: #{tpu_custom_call.1} parent=1 // pred_check_branch
      %962 = sbr.rel (0) target = $region45
    $region44: #{tpu_custom_call.1} parent=1 // pred_region
      %963 = dma.done [#allocation4], 128
    $region45: #{tpu_custom_call.1} parent=1 // pred_fallthru
      _
    %964 = vsyncpa [#allocation3], 1
    %965 = vsyncpa [#allocation6], 1
    %966 = vsyncpa [#allocation9], 1
    %967 = vsyncpa [#allocation4], 1

</llo_original>
